<compile_context>
chip_gen: v7x
topology: tpu7x:2x2x1
jax: 0.10.0
libtpu: 0.0.40
codegen_flags: <defaults>
</compile_context>

<pallas_src>
import jax
import jax.numpy as jnp
from jax.experimental import pallas as pl
from jax.experimental.pallas import tpu as pltpu


def _focus_conv_kernel(x_ref, w_ref, shift_ref, o_ref):
    # x_ref:     (Cin, T)   channel-major activation tile (bf16)
    # w_ref:     (C2, Cin)  1x1-conv weight with BN scale folded in (bf16)
    # shift_ref: (C2, 1)    folded BN shift = beta - mean * gamma / sqrt(var + eps)
    # o_ref:     (C2, T)    lane-dense output tile (f32)
    acc = jnp.dot(w_ref[...], x_ref[...], preferred_element_type=jnp.float32)
    y = acc + shift_ref[...]
    # LeakyReLU(0.1)
    o_ref[...] = jnp.where(y > 0, y, 0.1 * y).astype(o_ref.dtype)


def _choose_spatial_tile(m, target=8192):
    """Pick a spatial tile T and padded extent Sp.

    T is either the full extent (always legal) or a multiple of 128 that divides Sp.
    Padding, when needed at all, is at most 127 columns (vs. padding whole M tiles
    in the previous version).
    """
    if m <= target:
        return m, m
    top = target - (target % 128)
    for t in range(top, 127, -128):
        if m % t == 0:
            return t, m
    mp = pl.cdiv(m, 128) * 128
    for t in range(top, 127, -128):
        if mp % t == 0:
            return t, mp
    return 128, mp


def focus_forward(x, conv_w, bn_gamma, bn_beta, bn_mean, bn_var, eps=1e-5,
                  spatial_tile_target=8192, compute_dtype=jnp.bfloat16):
    """x: (B, C1, H, W) float32 NCHW. conv_w: (C2, 4*C1, 1, 1). Returns (B, C2, H//2, W//2)."""
    B, C1, H, W = x.shape
    C2 = conv_w.shape[0]
    Ho, Wo = H // 2, W // 2
    Cin = 4 * C1
    Msp = Ho * Wo

    # --- glue: Focus space-to-depth (same ordering as torch.cat), cast to bf16 first
    # so the single materialized copy is half-width. Result is already channel-major.
    xc = x.astype(compute_dtype)
    patches = jnp.concatenate(
        [xc[..., ::2, ::2], xc[..., 1::2, ::2], xc[..., ::2, 1::2], xc[..., 1::2, 1::2]],
        axis=1,
    )  # (B, Cin, Ho, Wo)
    xm = patches.reshape(B, Cin, Msp)  # free reshape (contiguous), no transpose

    T, Sp = _choose_spatial_tile(Msp, spatial_tile_target)
    if Sp != Msp:
        xm = jnp.pad(xm, ((0, 0), (0, 0), (0, Sp - Msp)))

    # Fold BN (inference) scale into the conv weight; keep only the shift for the kernel.
    inv_std = (bn_gamma / jnp.sqrt(bn_var + eps)).astype(jnp.float32)
    wm = (conv_w.reshape(C2, Cin).astype(jnp.float32) * inv_std[:, None]).astype(compute_dtype)
    shift = (bn_beta - bn_mean * inv_std).reshape(C2, 1).astype(jnp.float32)

    n_tiles = Sp // T
    cost = pl.CostEstimate(
        flops=2 * B * Sp * Cin * C2,
        transcendentals=0,
        bytes_accessed=(B * Sp * Cin * xm.dtype.itemsize
                        + Cin * C2 * wm.dtype.itemsize
                        + C2 * 4
                        + B * Sp * C2 * 4),
    )

    out = pl.pallas_call(
        _focus_conv_kernel,
        out_shape=jax.ShapeDtypeStruct((B, C2, Sp), jnp.float32),
        grid_spec=pltpu.PrefetchScalarGridSpec(
            num_scalar_prefetch=0,
            grid=(B, n_tiles),
            in_specs=[
                pl.BlockSpec((None, Cin, T), lambda b, s: (b, 0, s)),  # activations tile
                pl.BlockSpec((C2, Cin), lambda b, s: (0, 0)),          # scaled weight (small)
                pl.BlockSpec((C2, 1), lambda b, s: (0, 0)),            # BN shift
            ],
            out_specs=pl.BlockSpec((None, C2, T), lambda b, s: (b, 0, s)),
        ),
        compiler_params=pltpu.CompilerParams(
            dimension_semantics=("parallel", "parallel")),
        cost_estimate=cost,
    )(xm, wm, shift)

    out = out[:, :, :Msp]
    # (B, C2, Ho*Wo) -> (B, C2, Ho, Wo): free reshape, already NCHW.
    return out.reshape(B, C2, Ho, Wo)


def _reference(x, conv_w, bn_gamma, bn_beta, bn_mean, bn_var, eps=1e-5):
    """Pure-JAX f32 reference mirroring the PyTorch forward (eval-mode BN)."""
    patches = jnp.concatenate(
        [x[..., ::2, ::2], x[..., 1::2, ::2], x[..., ::2, 1::2], x[..., 1::2, 1::2]],
        axis=1,
    )
    y = jax.lax.conv_general_dilated(
        patches, conv_w, window_strides=(1, 1), padding="VALID",
        dimension_numbers=("NCHW", "OIHW", "NCHW"),
    )
    scale = (bn_gamma / jnp.sqrt(bn_var + eps)).reshape(1, -1, 1, 1)
    shift = (bn_beta - bn_mean * bn_gamma / jnp.sqrt(bn_var + eps)).reshape(1, -1, 1, 1)
    y = y * scale + shift
    return jnp.where(y > 0, y, 0.1 * y)


if __name__ == "__main__":
    # Focus(c1=4, c2=32, k=1, s=1) -> Conv2d(16, 32, 1, 1, bias=False) + BN + LeakyReLU(0.1)
    B, C1, H, W = 2, 4, 16, 16
    C2 = 32
    Cin = 4 * C1

    key = jax.random.PRNGKey(0)
    kx, kw = jax.random.split(key)
    x = jax.random.normal(kx, (B, C1, H, W), dtype=jnp.float32)

    # Deterministic "kaiming-uniform-like" conv weight; BN params at __init__ defaults.
    bound = 1.0 / (Cin ** 0.5)
    conv_w = jax.random.uniform(kw, (C2, Cin, 1, 1), dtype=jnp.float32,
                                minval=-bound, maxval=bound)
    bn_gamma = jnp.ones((C2,), jnp.float32)
    bn_beta = jnp.zeros((C2,), jnp.float32)
    bn_mean = jnp.zeros((C2,), jnp.float32)
    bn_var = jnp.ones((C2,), jnp.float32)

    out = focus_forward(x, conv_w, bn_gamma, bn_beta, bn_mean, bn_var)
    out = jax.block_until_ready(out)

    ref = _reference(x, conv_w, bn_gamma, bn_beta, bn_mean, bn_var)
    assert out.shape == (B, C2, H // 2, W // 2), out.shape
    # Tolerance loosened vs. the f32 reference because activations/weights run in bf16.
    assert jnp.allclose(out, ref, atol=3e-2, rtol=3e-2), float(jnp.max(jnp.abs(out - ref)))

    print("KERNEL_OK")
</pallas_src>

<mosaic_0001>
module attributes {stable_mosaic.version = 11 : i64} {
  func.func @_focus_conv_kernel(%arg0: i32, %arg1: i32, %arg2: memref<1x16x64xbf16, #tpu.memory_space<vmem>>, %arg3: memref<32x16xbf16, #tpu.memory_space<vmem>>, %arg4: memref<32x1xf32, #tpu.memory_space<vmem>>, %arg5: memref<1x32x64xf32, #tpu.memory_space<vmem>>) attributes {dimension_semantics = [#tpu.dimension_semantics<parallel>, #tpu.dimension_semantics<parallel>], iteration_bounds = array<i64: 2, 1>, scalar_prefetch = 0 : i64, scratch_operands = 0 : i64, tpu.core_type = #tpu.core_type<tc>, window_params = [{transform_indices = @transform_0, window_bounds = array<i64: 1, 16, 64>}, {pipeline_mode = #tpu.pipeline_mode<synchronous>, transform_indices = @transform_1, window_bounds = array<i64: 32, 16>}, {pipeline_mode = #tpu.pipeline_mode<synchronous>, transform_indices = @transform_2, window_bounds = array<i64: 32, 1>}, {transform_indices = @transform_3, window_bounds = array<i64: 1, 32, 64>}]} {
    %c0 = arith.constant 0 : index
    %c0_0 = arith.constant 0 : index
    %0 = vector.load %arg3[%c0, %c0_0] : memref<32x16xbf16, #tpu.memory_space<vmem>>, vector<32x16xbf16>
    %c0_1 = arith.constant 0 : index
    %c0_2 = arith.constant 0 : index
    %c0_3 = arith.constant 0 : index
    %1 = vector.load %arg2[%c0_1, %c0_2, %c0_3] : memref<1x16x64xbf16, #tpu.memory_space<vmem>>, vector<1x16x64xbf16>
    %2 = vector.shape_cast %1 : vector<1x16x64xbf16> to vector<16x64xbf16>
    %cst = arith.constant dense<0.000000e+00> : vector<32x64xf32>
    %3 = tpu.matmul %0, %2, %cst {dimension_numbers = #tpu.dot_dimension_numbers<[1], [0], [0], [1], [0, 0, 1, 1], [], []>} : vector<32x16xbf16>, vector<16x64xbf16>, vector<32x64xf32> -> vector<32x64xf32>
    %c0_4 = arith.constant 0 : index
    %c0_5 = arith.constant 0 : index
    %4 = vector.load %arg4[%c0_4, %c0_5] : memref<32x1xf32, #tpu.memory_space<vmem>>, vector<32x1xf32>
    %5 = vector.broadcast %4 : vector<32x1xf32> to vector<32x64xf32>
    %6 = arith.addf %3, %5 : vector<32x64xf32>
    %cst_6 = arith.constant 0.000000e+00 : f32
    %7 = vector.broadcast %cst_6 : f32 to vector<32x64xf32>
    %8 = arith.cmpf ogt, %6, %7 : vector<32x64xf32>
    %cst_7 = arith.constant 1.000000e-01 : f32
    %9 = vector.broadcast %cst_7 : f32 to vector<32x64xf32>
    %10 = arith.mulf %9, %6 : vector<32x64xf32>
    %11 = arith.select %8, %6, %10 : vector<32x64xi1>, vector<32x64xf32>
    %c0_8 = arith.constant 0 : index
    %c0_9 = arith.constant 0 : index
    %c0_10 = arith.constant 0 : index
    %12 = vector.load %arg5[%c0_8, %c0_9, %c0_10] : memref<1x32x64xf32, #tpu.memory_space<vmem>>, vector<1x32x64xf32>
    %13 = vector.shape_cast %12 : vector<1x32x64xf32> to vector<32x64xf32>
    %14 = vector.shape_cast %11 : vector<32x64xf32> to vector<1x32x64xf32>
    tpu.vector_store %arg5[%c0_8, %c0_9, %c0_10], %14 {strides = array<i32>} : memref<1x32x64xf32, #tpu.memory_space<vmem>>, vector<1x32x64xf32>,
    return
  }
  func.func @transform_0(%arg0: i32, %arg1: i32) -> (i32, i32, i32) {
    %c0_i32 = arith.constant 0 : i32
    %c0_i32_0 = arith.constant 0 : i32
    return %arg0, %c0_i32, %arg1 : i32, i32, i32
  }
  func.func @transform_1(%arg0: i32, %arg1: i32) -> (i32, i32) {
    %c0_i32 = arith.constant 0 : i32
    %c0_i32_0 = arith.constant 0 : i32
    %c0_i32_1 = arith.constant 0 : i32
    return %c0_i32, %c0_i32_0 : i32, i32
  }
  func.func @transform_2(%arg0: i32, %arg1: i32) -> (i32, i32) {
    %c0_i32 = arith.constant 0 : i32
    %c0_i32_0 = arith.constant 0 : i32
    %c0_i32_1 = arith.constant 0 : i32
    return %c0_i32, %c0_i32_0 : i32, i32
  }
  func.func @transform_3(%arg0: i32, %arg1: i32) -> (i32, i32, i32) {
    %c0_i32 = arith.constant 0 : i32
    %c0_i32_0 = arith.constant 0 : i32
    return %arg0, %c0_i32, %arg1 : i32, i32, i32
  }
}

</mosaic_0001>

<llo_original>
// kernel: tpu_custom_call.1
$region0: #{tpu_custom_call.1}
  #allocation0 [shape = 'u32[]', space=smem, size = 0x4, offset = 0x4, fixed_abs, tag = 'smem constant byte address 0x4 - core index']
  #allocation1 [shape = 'u32[144,128]{1,0:T(1,128)}', space=vmem, size = 0x12000, scoped, tag = 'internal scratch']
  %s0 = inlined_call_operand.vmem [shape: bf16[2,16,64], index: 0, kind: input, shape index: {}]
  %s1 = inlined_call_operand.vmem [shape: bf16[32,16], index: 1, kind: input, shape index: {}]
  %s2 = inlined_call_operand.vmem [shape: f32[32,1], index: 2, kind: input, shape index: {}]
  %s3 = inlined_call_operand.hbm [shape: f32[2,32,64], index: 3, kind: output, shape index: {}]
  %s4 = sld [smem:[#allocation0]]
  $region45: #{tpu_custom_call.1} parent=0
    _
  %s6 = ssub.s32 1, %s4
  %s7 = scalar_select 0, %s6, %s4
  $region1: #{tpu_custom_call.1} parent=0
    #allocation2 [shape = 'u8[32768]{0}', space=vmem, size = 0x8000, scoped, tag = 'output window, operand 0']
    #allocation3 [shape = 's32[2]{0}', space=sflag, size = 0x8, scoped, tag = 'scoped memory for tpu_custom_call.1']
    %8 = vsyncpa [#allocation3], 0
    %s9 = scalar_lea.sflag [#allocation3], 1
    %10 = vsyncpa %s9, 0
    loop: start=0, step=1, limit=4
    $region2: #{tpu_custom_call.1} parent=1 // loop_pre_header
      _
    $region3: #{tpu_custom_call.1} parent=1 // loop_header
      %s12 = sphi 0, %s16
      %p13 = scmp.ge.s32.totalorder %s12, 4
      %s19 = sphi 0, %s31
      %s20 = sphi 0, %s27
      %s21 = sphi 0, %s19
      %s22 = sphi 0, %s20
      %s23 = sphi 0, %s21
      %s24 = sphi 0, %s22
      %s36 = sphi 0, %s38
      %s39 = sphi 0, %s36
      %s40 = sphi 0, %s39
      %s56 = sphi 0, %s40
      %s60 = sphi 0, %s60
      %s62 = sphi 0, %s60
      %s63 = sphi 0, %s62
      %s77 = sphi 0, %s63
      %s81 = sphi 0, %s81
      %s83 = sphi 0, %s81
      %s84 = sphi 0, %s83
      %s98 = sphi 0, %s84
      %s106 = sphi 0, %s108
      %s109 = sphi 0, %s106
      %s110 = sphi 0, %s109
      %s126 = sphi 0, %s110
    $region4: #{tpu_custom_call.1} parent=1 // loop_header_branch
      %15 = sbr.rel (%p13) target = $region8
    $region5: #{tpu_custom_call.1} parent=1 // loop_body
      %s17 = ssub.s32 %s12, 1
      %s18 = ssub.s32 %s12, 2
      %s25 = sadd.s32 1, %s20
      %p26 = scmp.ge.s32.totalorder %s25, 1
      %s27 = scalar_select %p26, 0, %s25
      %s28 = sadd.s32 1, %s19
      %s29 = scalar_select %p26, %s28, %s19
      %p30 = scmp.ge.s32.totalorder %s29, 2
      %s31 = scalar_select %p30, 0, %s29
      %s32 = ssub.s32 %s19, %s31
      %s33 = ssub.s32 %s20, %s27
      %s34 = sor.u32 %s32, %s33
      %p35 = scmp.eq.s32.totalorder %s34, 0
      %s37 = sadd.s32 %s36, 1
      %s38 = scalar_select %p35, %s36, %s37
      %p41 = pneg %p35
      %p42 = scmp.eq.s32.totalorder %s12, 1
      %p43 = por %p41, %p42
      %p44 = scmp.ne.s32.totalorder %s36, %s39
      %p45 = scmp.eq.s32.totalorder %s12, 0
      %p46 = por %p44, %p45
      %p47 = scmp.ne.s32.totalorder %s36, %s39
      %p48 = scmp.eq.s32.totalorder %s17, 1
      %p49 = por %p47, %p48
      %p50 = scmp.ne.s32.totalorder %s39, %s40
      %p51 = scmp.eq.s32.totalorder %s17, 0
      %p52 = por %p50, %p51
      %p53 = scmp.ne.s32.totalorder %s39, %s40
      %p54 = scmp.eq.s32.totalorder %s18, 1
      %p55 = por %p53, %p54
      %p57 = scmp.ne.s32.totalorder %s40, %s56
      %p58 = scmp.eq.s32.totalorder %s18, 0
      %p59 = por %p57, %p58
      %s61 = sadd.s32 %s60, 1
      %p64 = scmp.eq.s32.totalorder %s12, 1
      %p65 = scmp.ne.s32.totalorder %s60, %s62
      %p66 = scmp.eq.s32.totalorder %s12, 0
      %p67 = por %p65, %p66
      %p68 = scmp.ne.s32.totalorder %s60, %s62
      %p69 = scmp.eq.s32.totalorder %s17, 1
      %p70 = por %p68, %p69
      %p71 = scmp.ne.s32.totalorder %s62, %s63
      %p72 = scmp.eq.s32.totalorder %s17, 0
      %p73 = por %p71, %p72
      %p74 = scmp.ne.s32.totalorder %s62, %s63
      %p75 = scmp.eq.s32.totalorder %s18, 1
      %p76 = por %p74, %p75
      %p78 = scmp.ne.s32.totalorder %s63, %s77
      %p79 = scmp.eq.s32.totalorder %s18, 0
      %p80 = por %p78, %p79
      %s82 = sadd.s32 %s81, 1
      %p85 = scmp.eq.s32.totalorder %s12, 1
      %p86 = scmp.ne.s32.totalorder %s81, %s83
      %p87 = scmp.eq.s32.totalorder %s12, 0
      %p88 = por %p86, %p87
      %p89 = scmp.ne.s32.totalorder %s81, %s83
      %p90 = scmp.eq.s32.totalorder %s17, 1
      %p91 = por %p89, %p90
      %p92 = scmp.ne.s32.totalorder %s83, %s84
      %p93 = scmp.eq.s32.totalorder %s17, 0
      %p94 = por %p92, %p93
      %p95 = scmp.ne.s32.totalorder %s83, %s84
      %p96 = scmp.eq.s32.totalorder %s18, 1
      %p97 = por %p95, %p96
      %p99 = scmp.ne.s32.totalorder %s84, %s98
      %p100 = scmp.eq.s32.totalorder %s18, 0
      %p101 = por %p99, %p100
      %s102 = ssub.s32 %s19, %s31
      %s103 = ssub.s32 %s20, %s27
      %s104 = sor.u32 %s102, %s103
      %p105 = scmp.eq.s32.totalorder %s104, 0
      %s107 = sadd.s32 %s106, 1
      %s108 = scalar_select %p105, %s106, %s107
      %p111 = pneg %p105
      %p112 = scmp.eq.s32.totalorder %s12, 1
      %p113 = por %p111, %p112
      %p114 = scmp.ne.s32.totalorder %s106, %s109
      %p115 = scmp.eq.s32.totalorder %s12, 0
      %p116 = por %p114, %p115
      %p117 = scmp.ne.s32.totalorder %s106, %s109
      %p118 = scmp.eq.s32.totalorder %s17, 1
      %p119 = por %p117, %p118
      %p120 = scmp.ne.s32.totalorder %s109, %s110
      %p121 = scmp.eq.s32.totalorder %s17, 0
      %p122 = por %p120, %p121
      %p123 = scmp.ne.s32.totalorder %s109, %s110
      %p124 = scmp.eq.s32.totalorder %s18, 1
      %p125 = por %p123, %p124
      %p127 = scmp.ne.s32.totalorder %s110, %s126
      %p128 = scmp.eq.s32.totalorder %s18, 0
      %p129 = por %p127, %p128
      %p130 = scmp.le.s32.totalorder 1, %s12
      %p131 = scmp.lt.s32.totalorder %s12, 3
      %p132 = pnand %p130, %p131
      %p133 = pneg %p132
      // Predicated region
      $region9: #{tpu_custom_call.1} parent=5 // pred_check
        _
      $region10: #{tpu_custom_call.1} parent=5 // pred_check_branch
        %135 = sbr.rel (%p132) target = $region12
      $region11: #{tpu_custom_call.1} parent=5 // pred_region
        %s136 = ssub.s32 %s12, 1
        // Predicated region
        $region13: #{tpu_custom_call.1} parent=11 // pred_check
          %p137 = pneg %p73
        $region14: #{tpu_custom_call.1} parent=11 // pred_check_branch
          %139 = sbr.rel (%p137) target = $region16
        $region15: #{tpu_custom_call.1} parent=11 // pred_region
          _
        $region16: #{tpu_custom_call.1} parent=11 // pred_fallthru
          _
        // Predicated region
        $region17: #{tpu_custom_call.1} parent=11 // pred_check
          %p140 = pneg %p94
        $region18: #{tpu_custom_call.1} parent=11 // pred_check_branch
          %142 = sbr.rel (%p140) target = $region20
        $region19: #{tpu_custom_call.1} parent=11 // pred_region
          _
        $region20: #{tpu_custom_call.1} parent=11 // pred_fallthru
          _
      $region12: #{tpu_custom_call.1} parent=5 // pred_fallthru
        _
      %p143 = scmp.lt.s32.totalorder %s12, 2
      // Predicated region
      $region21: #{tpu_custom_call.1} parent=5 // pred_check
        %p144 = pneg %p143
      $region22: #{tpu_custom_call.1} parent=5 // pred_check_branch
        %146 = sbr.rel (%p144) target = $region24
      $region23: #{tpu_custom_call.1} parent=5 // pred_region
        // Predicated region
        $region25: #{tpu_custom_call.1} parent=23 // pred_check
          %p147 = pneg %p46
        $region26: #{tpu_custom_call.1} parent=23 // pred_check_branch
          %149 = sbr.rel (%p147) target = $region28
        $region27: #{tpu_custom_call.1} parent=23 // pred_region
          %p150 = scmp.lt.s32.totalorder %s19, 1
          %s151 = scalar_select %p150, %s19, 1
          %p152 = scmp.lt.s32.totalorder %s20, 0
          %s153 = scalar_select %p152, %s20, 0
          %s154 = smul.addr %s151, 2
          %s155 = sadd.s32 %s153, %s154
          %s156 = smul.addr %s155, 4
          %s157 = scalar_lea.vmem %s0, %s156
        $region28: #{tpu_custom_call.1} parent=23 // pred_fallthru
          _
      $region24: #{tpu_custom_call.1} parent=5 // pred_fallthru
        _
      %p158 = scmp.le.s32.totalorder 1, %s12
      %p159 = scmp.lt.s32.totalorder %s12, 3
      %p160 = pnand %p158, %p159
      %p161 = pneg %p160
      // Predicated region
      $region29: #{tpu_custom_call.1} parent=5 // pred_check
        _
      $region30: #{tpu_custom_call.1} parent=5 // pred_check_branch
        %163 = sbr.rel (%p160) target = $region32
      $region31: #{tpu_custom_call.1} parent=5 // pred_region
        %s164 = ssub.s32 %s12, 1
        %p165 = scmp.lt.s32.totalorder %s21, 1
        %s166 = scalar_select %p165, %s21, 1
        %p167 = scmp.lt.s32.totalorder %s22, 0
        %s168 = scalar_select %p167, %s22, 0
        %s169 = smul.addr %s166, 2
        %s170 = sadd.s32 %s168, %s169
        %s171 = smul.addr %s170, 4
        %s172 = scalar_lea.vmem %s0, %s171
        %p173 = pneg %p52
        %p174 = pneg %p49
        %p175 = pneg %p73
        %p176 = pneg %p70
        %p177 = pneg %p94
        %p178 = pneg %p91
        %p179 = pneg %p122
        %p180 = pneg %p119
        %s181 = sand.u32 %s109, 1
        %s182 = scalar_lea.sflag [#allocation3], %s181
        %s183 = sand.u32 %s109, 1
        %s184 = smul.addr %s183, 32
        %s185 = scalar_lea.vmem [#allocation2], %s184
        %p186 = scmp.lt.s32.totalorder %s21, 1
        %s187 = scalar_select %p186, %s21, 1
        %p188 = scmp.lt.s32.totalorder %s22, 0
        %s189 = scalar_select %p188, %s22, 0
        %s190 = smul.addr %s187, 2
        %s191 = sadd.s32 %s189, %s190
        %s192 = smul.addr %s191, 4
        %s193 = scalar_lea.vmem %s0, %s192
        %v195 = vld [vmem:[%s1] sm:$0xf]
        %v196 = vld [vmem:[%s1 + $0x4] sm:$0xf]
        %v197 = vld [vmem:[%s1 + $0x8] sm:$0xf]
        %v198 = vld [vmem:[%s1 + $0xc] sm:$0xf]
        %v199 = vld [vmem:[%s193] sm:$0xf]
        %v200 = vld [vmem:[%s193 + $0x4] sm:$0xf]
        %v201 = vld [vmem:[%s2] sm:$0xff]
        %v202 = vld [vmem:[%s2 + $0x8] sm:$0xff]
        %v203 = vld [vmem:[%s2 + $0x10] sm:$0xff]
        %v204 = vld [vmem:[%s2 + $0x18] sm:$0xff]
        %206 = vset.pattern.permute.xlu0 0
        %207 = vperm.xlu0 %206, %v201
        %v208 = vpop.permute.xlu0 %207
        %211 = vset.pattern.permute.xlu0 0
        %212 = vperm.xlu0 %211, %v202
        %v213 = vpop.permute.xlu0 %212
        %216 = vset.pattern.permute.xlu0 0
        %217 = vperm.xlu0 %216, %v203
        %v218 = vpop.permute.xlu0 %217
        %221 = vset.pattern.permute.xlu0 0
        %222 = vperm.xlu0 %221, %v204
        %v223 = vpop.permute.xlu0 %222
        %v229 = vunpack.c.l.b16 %v195
        %v230 = vunpack.c.l.b16 %v196
        %v231 = vunpack.c.l.b16 %v197
        %v232 = vunpack.c.l.b16 %v198
        %v233 = vpack.c.b16 %v230, %v229
        %v234 = vpack.c.b16 %v232, %v231
        %v237 = vunpack.c.l.b16 %v199
        %v238 = vunpack.c.l.b16 %v200
        %v239 = vpack.c.b16 %v238, %v237
        %vm241 = vcmask 130048
        %v243 = vsel %vm241, %v233, 0
        %v246 = vsel %vm241, %v234, 0
        %248 = vmatprep.subr.bf16.mxu0 0
        %249 = vmatpush1.bf16.msra.mxu0 %v239
        %250 = vmatprep.subr.bf16.mxu0 0
        %251 = vmatpush1.bf16.msra.mxu0 0
        %252 = vmatprep.subr.bf16.mxu0 0
        %253 = vmatpush1.bf16.msra.mxu0 0
        %254 = vmatprep.subr.bf16.mxu0 0
        %255 = vmatpush1.bf16.msra.mxu0 0
        %256 = vmatprep.subr.bf16.mxu0 0
        %257 = vmatpush1.bf16.msra.mxu0 0
        %258 = vmatprep.subr.bf16.mxu0 0
        %259 = vmatpush1.bf16.msra.mxu0 0
        %260 = vmatprep.subr.bf16.mxu0 0
        %261 = vmatpush1.bf16.msra.mxu0 0
        %262 = vmatprep.subr.bf16.mxu0 0
        %263 = vmatpush1.bf16.msra.mxu0 0
        %264 = vmatprep.subr.bf16.mxu0 0
        %265 = vmatpush1.bf16.msra.mxu0 0
        %266 = vmatprep.subr.bf16.mxu0 0
        %267 = vmatpush1.bf16.msra.mxu0 0
        %268 = vmatprep.subr.bf16.mxu0 0
        %269 = vmatpush1.bf16.msra.mxu0 0
        %270 = vmatprep.subr.bf16.mxu0 0
        %271 = vmatpush1.bf16.msra.mxu0 0
        %272 = vmatprep.subr.bf16.mxu0 0
        %273 = vmatpush1.bf16.msra.mxu0 0
        %274 = vmatprep.subr.bf16.mxu0 0
        %275 = vmatpush1.bf16.msra.mxu0 0
        %276 = vmatprep.subr.bf16.mxu0 0
        %277 = vmatpush1.bf16.msra.mxu0 0
        %278 = vmatprep.subr.bf16.mxu0 0
        %279 = vmatpush1.bf16.msra.mxu0 0
        %280 = vmatprep.mubr.bf16.mxu0 0
        %281 = vmatmul.mubr.bf16.gmra.mrb[0].mxu0 %v243
        %v282 = vpop.f32.mrb[0].mxu0
        %v283 = vadd.f32 %v208, %v282
        %v284 = vpop.f32.mrb[0].mxu0
        %v285 = vpop.f32.mrb[0].mxu0
        %v286 = vadd.f32 %v213, %v285
        %v287 = vpop.f32.mrb[0].mxu0
        %288 = vmatprep.mubr.bf16.mxu0 0
        %289 = vmatmul.mubr.bf16.gmra.mrb[0].mxu0 %v246
        %v290 = vpop.f32.mrb[0].mxu0
        %v291 = vadd.f32 %v218, %v290
        %v292 = vpop.f32.mrb[0].mxu0
        %v293 = vpop.f32.mrb[0].mxu0
        %v294 = vadd.f32 %v223, %v293
        %v295 = vpop.f32.mrb[0].mxu0
        %296 = vdwg.mxu0
        %vm297 = vcmp.gt.f32.partialorder %v283, 0.0
        %vm298 = vcmp.gt.f32.partialorder %v286, 0.0
        %vm299 = vcmp.gt.f32.partialorder %v291, 0.0
        %vm300 = vcmp.gt.f32.partialorder %v294, 0.0
        %v301 = vmul.f32 %v283, 0.1
        %v302 = vmul.f32 %v286, 0.1
        %v303 = vmul.f32 %v291, 0.1
        %v304 = vmul.f32 %v294, 0.1
        %v305 = vsel %vm297, %v283, %v301
        %v306 = vsel %vm298, %v286, %v302
        %v307 = vsel %vm299, %v291, %v303
        %v308 = vsel %vm300, %v294, %v304
        %vm309 = vcmask 523264
        %310 = vst.msk [vmem:[%s185] sm:$0xff] %vm309, %v305
        %311 = vst.msk [vmem:[%s185 + $0x8] sm:$0xff] %vm309, %v306
        %312 = vst.msk [vmem:[%s185 + $0x10] sm:$0xff] %vm309, %v307
        %313 = vst.msk [vmem:[%s185 + $0x18] sm:$0xff] %vm309, %v308
        %s314 = sand.u32 %s109, 1
        %s315 = scalar_lea.sflag [#allocation3], %s314
        %s316 = sand.u32 %s109, 1
        %s317 = smul.addr %s316, 32
        %s318 = scalar_lea.vmem [#allocation2], %s317
        // Predicated region
        $region33: #{tpu_custom_call.1} parent=31 // pred_check
          %p319 = pneg %p119
        $region34: #{tpu_custom_call.1} parent=31 // pred_check_branch
          %321 = sbr.rel (%p319) target = $region36
        $region35: #{tpu_custom_call.1} parent=31 // pred_region
          %s323 = ssub.s32 512, 512
          %324 = vsyncadd %s315, %s323
          %s325 = smul.addr %s21, 4
          %s326 = sadd.s32 %s22, %s325
          %s327 = smul.addr %s326, 128
          %s328 = scalar_lea.hbm %s3, %s327
          %s329 = sshll.u32 %s318, 4
          %s330 = int_to_ptr.vmem [resolvable:$true] %s329
          %335 = dma.vmem_to_hbm [thread:$0]  %s330, 512, %s328, %s315, 128, 128, 8
        $region36: #{tpu_custom_call.1} parent=31 // pred_fallthru
          _
      $region32: #{tpu_custom_call.1} parent=5 // pred_fallthru
        _
      %p336 = scmp.le.s32.totalorder 2, %s12
      // Predicated region
      $region37: #{tpu_custom_call.1} parent=5 // pred_check
        %p337 = pneg %p336
      $region38: #{tpu_custom_call.1} parent=5 // pred_check_branch
        %339 = sbr.rel (%p337) target = $region40
      $region39: #{tpu_custom_call.1} parent=5 // pred_region
        %s340 = ssub.s32 %s12, 2
        // Predicated region
        $region41: #{tpu_custom_call.1} parent=39 // pred_check
          %p341 = pneg %p125
        $region42: #{tpu_custom_call.1} parent=39 // pred_check_branch
          %343 = sbr.rel (%p341) target = $region44
        $region43: #{tpu_custom_call.1} parent=39 // pred_region
          %s344 = sand.u32 %s110, 1
          %s345 = scalar_lea.sflag [#allocation3], %s344
          %s346 = sand.u32 %s110, 1
          %s347 = smul.addr %s346, 32
          %s348 = scalar_lea.vmem [#allocation2], %s347
          %349 = dma.done %s345, 512
        $region44: #{tpu_custom_call.1} parent=39 // pred_fallthru
          _
      $region40: #{tpu_custom_call.1} parent=5 // pred_fallthru
        _
    $region6: #{tpu_custom_call.1} parent=1 // loop_footer
      %s16 = sadd.s32 1, %s12
    $region7: #{tpu_custom_call.1} parent=1 // loop_footer_branch
      %11 = sbr.rel target = $region3
    $region8: #{tpu_custom_call.1} parent=1 // loop_exit
      _
    %350 = vsyncpa [#allocation3], 1
    %s351 = scalar_lea.sflag [#allocation3], 1
    %352 = vsyncpa %s351, 1

</llo_original>
